<compile_context>
chip_gen: v7x
topology: tpu7x:2x2x1
jax: 0.10.0
libtpu: 0.0.40
codegen_flags: <defaults>
</compile_context>

<pallas_src>
import functools

import jax
import jax.numpy as jnp
from jax import lax
from jax.experimental import pallas as pl
from jax.experimental.pallas import tpu as pltpu


# ----------------------------------------------------------------------------
# helpers
# ----------------------------------------------------------------------------
def _round_up(x, m):
    return ((x + m - 1) // m) * m


_NEG = -1e30          # finite large-negative fill (avoids exp(-inf - -inf) NaN)
_TILE_CANDIDATES = (8192, 4096, 2048, 1024, 512, 256, 128)


def _vmem_limit_bytes():
    """Generation-aware VMEM limit (v5e/v6e: ~96 MiB; v7x: ~48 MiB)."""
    cap = 64 * 1024 * 1024                       # conservative default (v7x-sized)
    try:
        cap = int(pltpu.get_tpu_info().vmem_capacity_bytes)
    except Exception:
        pass
    return min((cap * 3) // 4, 96 * 1024 * 1024)


def _pick_tile(dim, bs_pad, n_pad):
    """Largest bank tile (multiple of 128 rows) fitting the VMEM budget."""
    limit = _vmem_limit_bytes()
    # Fixed overhead: double-buffered resident bf16 outputs block, double-
    # buffered f32 (bs_pad, 128) output slab, f32 scratch, misc slack.
    overhead = (2 * bs_pad * dim * 2 + 2 * bs_pad * 128 * 4
                + 4 * bs_pad * 4 * 4 + (2 << 20))
    budget = max(limit - overhead, 1 << 20)
    # Per bank-row cost: double-buffered bf16 tile row + ~4 live f32
    # [bs_pad, tile] temporaries (logits, exp, mask/cand, partial sums).
    per_row = 2 * dim * 2 + 4 * bs_pad * 4
    max_rows = budget // per_row
    tile = 128
    for t in _TILE_CANDIDATES:
        if t <= max_rows:
            tile = t
            break
    return min(tile, n_pad), limit


def prepare_memory_bank(bank_f32):
    """Store the memory bank once in bf16, padded to a multiple of 128 rows."""
    n, _ = bank_f32.shape
    n_pad = _round_up(max(n, 128), 128)
    data = bank_f32.astype(jnp.bfloat16)
    if n_pad != n:
        data = jnp.pad(data, ((0, n_pad - n), (0, 0)))
    return {"data": data, "n": int(n)}


# ----------------------------------------------------------------------------
# Kernel: streaming contrastive-similarity statistics over memory-bank tiles
#   per batch row b (over all bank rows j), with l_bj = (outputs[b].bank[j])/tau
#   (1/tau pre-folded into outputs):
#     E[b]      = sum_j exp(l_bj - m[b])         (max-stabilized partition fn)
#     L[b]      = sum_j exp(l_bj - m[b]) * l_bj  (for entropy losses)
#     m[b]      = max_j l_bj
#     argmax[b] = argmax_j l_bj                  (first occurrence, CD aux)
# ----------------------------------------------------------------------------
def _bank_stats_kernel(n_valid, has_pad, need_entropy, need_argmax,
                       x_ref, bank_ref, o_ref,
                       e_sc, l_sc, m_sc, arg_sc):
    j = pl.program_id(0)
    nj = pl.num_programs(0)

    x = x_ref[...]                                   # [bs_pad, dim]  bf16 (pre-scaled by 1/tau)
    b = bank_ref[...]                                # [tile_n, dim] bf16
    # outputs @ bank.T on the MXU (bf16 inputs, f32 accumulation)
    s = lax.dot_general(x, b, (((1,), (1,)), ((), ())),
                        preferred_element_type=jnp.float32)   # [bs_pad, tile_n]

    tile_n = s.shape[-1]
    col_row = lax.broadcasted_iota(jnp.int32, (1, tile_n), 1)  # [1, tile_n]

    if has_pad:
        # Only the last tile can contain padded / out-of-range bank rows;
        # build a [1, tile_n] validity row and SELECT (kills any NaN from the
        # ragged trailing block) — ~1 VPU op per logit element.
        last_limit = n_valid - (nj - 1) * tile_n
        local_limit = jnp.where(j == nj - 1, last_limit, tile_n)
        s = jnp.where(col_row < local_limit, s, _NEG)

    @pl.when(j == 0)
    def _init():
        m_sc[...] = jnp.full(m_sc.shape, -jnp.inf, jnp.float32)
        e_sc[...] = jnp.zeros(e_sc.shape, jnp.float32)
        if need_entropy:
            l_sc[...] = jnp.zeros(l_sc.shape, jnp.float32)
        if need_argmax:
            arg_sc[...] = jnp.zeros(arg_sc.shape, jnp.float32)

    m_old = m_sc[...]
    tile_max = jnp.max(s, axis=-1, keepdims=True)
    m_new = jnp.maximum(m_old, tile_max)             # always finite (fill is -1e30)
    corr = jnp.exp(m_old - m_new)                    # 0 on first tile (m_old = -inf)
    p = jnp.exp(s - m_new)

    e_sc[...] = e_sc[...] * corr + jnp.sum(p, axis=-1, keepdims=True)
    if need_entropy:
        l_sc[...] = l_sc[...] * corr + jnp.sum(p * s, axis=-1, keepdims=True)
    if need_argmax:
        col_ids = col_row + j * tile_n
        cand = jnp.where(s >= tile_max, col_ids, jnp.int32(2147483647))
        tile_arg = jnp.min(cand, axis=-1, keepdims=True).astype(jnp.float32)
        better = tile_max > m_old                    # strict > => first occurrence
        arg_sc[...] = jnp.where(better, tile_arg, arg_sc[...])
    m_sc[...] = m_new

    # Single lane-dense packed write on the last grid step.
    @pl.when(j == nj - 1)
    def _fin():
        lane = lax.broadcasted_iota(jnp.int32, o_ref.shape, 1)
        packed = jnp.where(lane == 0, e_sc[...], 0.0)
        if need_entropy:
            packed = packed + jnp.where(lane == 1, l_sc[...], 0.0)
        packed = packed + jnp.where(lane == 2, m_sc[...], 0.0)
        if need_argmax:
            packed = packed + jnp.where(lane == 3, arg_sc[...], 0.0)
        o_ref[...] = packed


def bank_stats(outputs, bank_data, n_valid, tau, *, need_entropy, need_argmax):
    """Stream the (bf16, 128-padded) memory bank; return per-row (E, L, m, argmax)."""
    bs, dim = outputs.shape
    n_pad = bank_data.shape[0]                      # multiple of 128, bf16
    bs_pad = _round_up(bs, 16)                      # bf16 sublane packing

    # Fold 1/tau into the tiny outputs matrix once (bs x dim), then bf16.
    x = (outputs.astype(jnp.float32) * (1.0 / float(tau))).astype(jnp.bfloat16)
    if bs_pad != bs:
        x = jnp.pad(x, ((0, bs_pad - bs), (0, 0)))

    tile_n, vmem_limit = _pick_tile(dim, bs_pad, n_pad)
    nj = int(pl.cdiv(n_pad, tile_n))
    has_pad = (nj * tile_n != n_valid)

    kernel = functools.partial(_bank_stats_kernel, int(n_valid), bool(has_pad),
                               bool(need_entropy), bool(need_argmax))

    out = pl.pallas_call(
        kernel,
        grid=(nj,),
        in_specs=[
            pl.BlockSpec((bs_pad, dim), lambda j: (0, 0)),   # outputs (resident)
            pl.BlockSpec((tile_n, dim), lambda j: (j, 0)),   # bank tile (streamed)
        ],
        out_specs=pl.BlockSpec((bs_pad, 128), lambda j: (0, 0)),
        out_shape=jax.ShapeDtypeStruct((bs_pad, 128), jnp.float32),
        scratch_shapes=[pltpu.VMEM((bs_pad, 1), jnp.float32)] * 4,
        compiler_params=pltpu.CompilerParams(
            dimension_semantics=("arbitrary",),
            vmem_limit_bytes=int(vmem_limit)),
    )(x, bank_data)

    stats = out[:bs]
    E = stats[:, 0]
    L = stats[:, 1]
    m = stats[:, 2]
    # argmax carried as f32 (exact for bank sizes < 2**24 rows)
    arg = stats[:, 3].astype(jnp.int32)
    return E, L, m, arg


# ----------------------------------------------------------------------------
# Momentum memory-bank update (updated_new_data_memory) — plain XLA: a
# grid=(1,) kernel over bs x dim is dominated by launch overhead.
# ----------------------------------------------------------------------------
def memory_update(outputs, gathered_bank, m):
    x = outputs.astype(jnp.float32)
    xn = x * lax.rsqrt(jnp.maximum(jnp.sum(x * x, axis=-1, keepdims=True), 1e-24))
    nd = gathered_bank.astype(jnp.float32) * m + (1.0 - m) * xn
    return nd * lax.rsqrt(jnp.maximum(jnp.sum(nd * nd, axis=-1, keepdims=True), 1e-24))


# ----------------------------------------------------------------------------
# JAX glue reproducing SSDALossModule.forward semantics
# ----------------------------------------------------------------------------
def reverse_domain(d):
    return "target" if d == "source" else "source"


def _compute_ID_loss(outputs, indices, bank, t):
    bs = outputs.shape[0]
    E, _, m, _ = bank_stats(outputs, bank["data"], bank["n"], t,
                            need_entropy=False, need_argmax=False)
    # ID numerator (row dot) in f32 XLA — trivial bs x dim work.
    gathered = jnp.take(bank["data"], indices, axis=0).astype(jnp.float32)
    rowdot = jnp.sum(outputs.astype(jnp.float32) * gathered, axis=-1) / t
    log_z = jnp.log(E) + m
    loss = -jnp.sum(rowdot - log_z) / bs
    return loss.reshape(1)


def _compute_CD_loss(outputs, bank_rev, t):
    bs = outputs.shape[0]
    E, L, m, arg = bank_stats(outputs, bank_rev["data"], bank_rev["n"], t,
                              need_entropy=True, need_argmax=True)
    # per-row entropy of softmax(logits): log Z - E_p[logit]
    ent = (jnp.log(E) + m) - L / E
    loss = jnp.sum(ent) / bs
    return loss.reshape(1), arg


def _compute_I2C_loss(outputs, centroids_rev_list, t):
    # Tiny centroid sets (k = 4..8): plain XLA beats per-set pallas_call launches.
    bs = outputs.shape[0]
    loss = jnp.zeros((1,), jnp.float32)
    for centroids in centroids_rev_list:
        logits = (outputs.astype(jnp.float32)
                  @ centroids.astype(jnp.float32).T) / t
        lse = jax.nn.logsumexp(logits, axis=-1, keepdims=True)
        p = jnp.exp(logits - lse)
        ent = lse[:, 0] - jnp.sum(p * logits, axis=-1)
        loss = loss + jnp.sum(ent) / bs
    return loss / len(centroids_rev_list)


def _compute_proto_loss(outputs, indices, labels_list, centroids_list,
                        phis_list, n_kmeans):
    bs = outputs.shape[0]
    loss = jnp.zeros((1,), jnp.float32)
    for labels, centroids, phis in zip(labels_list, centroids_list, phis_list):
        batch_labels = jnp.take(labels, indices, axis=0)
        batch_centroids = jnp.take(centroids, batch_labels, axis=0)
        batch_phis = jnp.take(phis, batch_labels, axis=0)
        num = jnp.sum(outputs * batch_centroids, axis=-1) / batch_phis      # [bs]
        logits = (outputs.astype(jnp.float32)
                  @ centroids.astype(jnp.float32).T) / phis[None, :]        # [bs,k]
        log_z = jax.nn.logsumexp(logits, axis=-1)
        loss = loss - jnp.sum(num - log_z) / bs
    return loss / n_kmeans


def ssda_forward(config, state, indices, outputs, domain):
    """Mirrors SSDALossModule.forward (single device: GPU broadcast is a no-op)."""
    # TODO(synk): torch.cuda.comm.broadcast multi-GPU replication has no
    # single-device Pallas equivalent; treated as identity here.
    bs = indices.shape[0]
    rev = reverse_domain(domain)
    loss = jnp.zeros((1,), jnp.float32)
    loss_part = []
    aux_list = {}

    for i, ls in enumerate(config["loss"]):
        name, args = ls.split("-")
        skip = (config["epoch"] <= config["start"][i]
                or config["epoch"] >= config["end"][i]
                or name in ["cls", "tgt", "semi", "norm"])
        if skip:
            l = jnp.zeros((1,), jnp.float32)
        else:
            t = config["t"][i]
            aux = None
            if name == "ID":
                # TODO(synk): sample_ratio random subsampling (random.sample) and
                # the 'all' cross-bank Z variant are omitted; config sets
                # sample_ratio=0 and uses 'each'.
                l = _compute_ID_loss(outputs, indices,
                                     state[f"memory_bank_{domain}"], t)
            elif name == "CD":
                l, aux = _compute_CD_loss(outputs,
                                          state[f"memory_bank_{rev}"], t)
            elif name == "I2C":
                l = _compute_I2C_loss(outputs,
                                      state[f"cluster_centroids_each_{rev}"], t)
            elif name == "proto":
                l = _compute_proto_loss(outputs, indices,
                                        state[f"cluster_labels_each_{domain}"],
                                        state[f"cluster_centroids_each_{domain}"],
                                        state[f"cluster_phi_each_{domain}"],
                                        config["n_kmeans"])
            else:
                l = jnp.zeros((1,), jnp.float32)
            aux_list[ls] = aux
        loss_part.append(l)
        loss = loss + l

    bank = state[f"memory_bank_{domain}"]
    gathered = jnp.take(bank["data"], indices, axis=0)
    new_data_memory = memory_update(outputs, gathered, config["m"])
    return loss, new_data_memory, loss_part, aux_list


# ----------------------------------------------------------------------------
# Demo / smoke test with deterministic synthetic parameters
# ----------------------------------------------------------------------------
def _l2norm(x):
    return x / jnp.maximum(jnp.linalg.norm(x, axis=-1, keepdims=True), 1e-12)


if __name__ == "__main__":
    key = jax.random.PRNGKey(0)
    bs, dim, n_bank = 8, 32, 256
    k_list = [4, 8]

    keys = jax.random.split(key, 12)
    outputs = _l2norm(jax.random.normal(keys[0], (bs, dim), jnp.float32))
    indices = jax.random.randint(keys[1], (bs,), 0, n_bank, jnp.int32)

    state = {}
    for di, dom in enumerate(("source", "target")):
        bank_f32 = _l2norm(jax.random.normal(keys[2 + di], (n_bank, dim),
                                             jnp.float32))
        state[f"memory_bank_{dom}"] = prepare_memory_bank(bank_f32)
        cents, labels, phis = [], [], []
        for ki, k in enumerate(k_list):
            kk = jax.random.fold_in(keys[4 + di], ki)
            cents.append(_l2norm(jax.random.normal(kk, (k, dim), jnp.float32)))
            labels.append(jax.random.randint(jax.random.fold_in(keys[6 + di], ki),
                                             (n_bank,), 0, k, jnp.int32))
            phis.append(0.05 + 0.15 * jax.random.uniform(
                jax.random.fold_in(keys[8 + di], ki), (k,), jnp.float32))
        state[f"cluster_centroids_each_{dom}"] = cents
        state[f"cluster_labels_each_{dom}"] = labels
        state[f"cluster_phi_each_{dom}"] = phis

    config = {
        "loss": ["ID-each", "CD-cross", "proto-each", "I2C-cross"],
        "t": [0.05, 0.05, 0.05, 0.05],
        "m": 0.5,
        "start": [-1, -1, -1, -1],
        "end": [1000, 1000, 1000, 1000],
        "epoch": 1,
        "k_list": k_list,
        "n_kmeans": len(k_list),
        "sample_ratio": 0,
    }

    result = ssda_forward(config, state, indices, outputs, "target")
    result = jax.block_until_ready(result)
    loss, new_mem, loss_part, aux_list = result

    assert loss.shape == (1,)
    assert bool(jnp.isfinite(loss).all())
    assert float(loss[0]) >= 0.0
    assert new_mem.shape == (bs, dim)
    assert bool(jnp.isfinite(new_mem).all())
    assert len(loss_part) == len(config["loss"])
    assert aux_list["CD-cross"].shape == (bs,)

    print("KERNEL_OK")
</pallas_src>

<mosaic_0001>
module attributes {stable_mosaic.version = 11 : i64} {
  func.func @_bank_stats_kernel(%arg0: i32, %arg1: memref<16x32xbf16, #tpu.memory_space<vmem>>, %arg2: memref<256x32xbf16, #tpu.memory_space<vmem>>, %arg3: memref<16x128xf32, #tpu.memory_space<vmem>>, %arg4: memref<16x1xf32, #tpu.memory_space<vmem>>, %arg5: memref<16x1xf32, #tpu.memory_space<vmem>>, %arg6: memref<16x1xf32, #tpu.memory_space<vmem>>, %arg7: memref<16x1xf32, #tpu.memory_space<vmem>>) attributes {dimension_semantics = [#tpu.dimension_semantics<arbitrary>], iteration_bounds = array<i64: 1>, scalar_prefetch = 0 : i64, scratch_operands = 4 : i64, tpu.core_type = #tpu.core_type<tc>, window_params = [{pipeline_mode = #tpu.pipeline_mode<synchronous>, transform_indices = @transform_0, window_bounds = array<i64: 16, 32>}, {transform_indices = @transform_1, window_bounds = array<i64: 256, 32>}, {pipeline_mode = #tpu.pipeline_mode<synchronous>, transform_indices = @transform_2, window_bounds = array<i64: 16, 128>}]} {
    %c0 = arith.constant 0 : index
    %c0_0 = arith.constant 0 : index
    %0 = vector.load %arg1[%c0, %c0_0] : memref<16x32xbf16, #tpu.memory_space<vmem>>, vector<16x32xbf16>
    %c0_1 = arith.constant 0 : index
    %c0_2 = arith.constant 0 : index
    %1 = vector.load %arg2[%c0_1, %c0_2] : memref<256x32xbf16, #tpu.memory_space<vmem>>, vector<256x32xbf16>
    %cst = arith.constant dense<0.000000e+00> : vector<16x256xf32>
    %2 = tpu.matmul %0, %1, %cst {dimension_numbers = #tpu.dot_dimension_numbers<[1], [1], [0], [0], [0, 0, 1, 0], [], []>} : vector<16x32xbf16>, vector<256x32xbf16>, vector<16x256xf32> -> vector<16x256xf32>
    %c0_i32 = arith.constant 0 : i32
    %3 = arith.cmpi eq, %arg0, %c0_i32 : i32
    %4 = arith.extui %3 : i1 to i32
    %c0_i32_3 = arith.constant 0 : i32
    %5 = arith.cmpi ne, %4, %c0_i32_3 : i32
    scf.if %5 {
      %cst_16 = arith.constant 0xFF800000 : f32
      %25 = vector.broadcast %cst_16 : f32 to vector<16x1xf32>
      %c0_17 = arith.constant 0 : index
      %c0_18 = arith.constant 0 : index
      %26 = vector.load %arg6[%c0_17, %c0_18] : memref<16x1xf32, #tpu.memory_space<vmem>>, vector<16x1xf32>
      tpu.vector_store %arg6[%c0_17, %c0_18], %25 {strides = array<i32>} : memref<16x1xf32, #tpu.memory_space<vmem>>, vector<16x1xf32>,
      %cst_19 = arith.constant 0.000000e+00 : f32
      %27 = vector.broadcast %cst_19 : f32 to vector<16x1xf32>
      %c0_20 = arith.constant 0 : index
      %c0_21 = arith.constant 0 : index
      %28 = vector.load %arg4[%c0_20, %c0_21] : memref<16x1xf32, #tpu.memory_space<vmem>>, vector<16x1xf32>
      tpu.vector_store %arg4[%c0_20, %c0_21], %27 {strides = array<i32>} : memref<16x1xf32, #tpu.memory_space<vmem>>, vector<16x1xf32>,
    } else {
    }
    %c0_4 = arith.constant 0 : index
    %c0_5 = arith.constant 0 : index
    %6 = vector.load %arg6[%c0_4, %c0_5] : memref<16x1xf32, #tpu.memory_space<vmem>>, vector<16x1xf32>
    %cst_6 = arith.constant dense<0xFF800000> : vector<16xf32>
    %7 = vector.multi_reduction <maximumf>, %2, %cst_6 [1] : vector<16x256xf32> to vector<16xf32>
    %8 = vector.shape_cast %7 : vector<16xf32> to vector<16x1xf32>
    %9 = arith.maximumf %6, %8 : vector<16x1xf32>
    %10 = arith.subf %6, %9 : vector<16x1xf32>
    %11 = math.exp %10 : vector<16x1xf32>
    %12 = vector.broadcast %9 : vector<16x1xf32> to vector<16x256xf32>
    %13 = arith.subf %2, %12 : vector<16x256xf32>
    %14 = math.exp %13 : vector<16x256xf32>
    %c0_7 = arith.constant 0 : index
    %c0_8 = arith.constant 0 : index
    %15 = vector.load %arg4[%c0_7, %c0_8] : memref<16x1xf32, #tpu.memory_space<vmem>>, vector<16x1xf32>
    %16 = arith.mulf %15, %11 : vector<16x1xf32>
    %cst_9 = arith.constant dense<0.000000e+00> : vector<16xf32>
    %17 = vector.multi_reduction <add>, %14, %cst_9 [1] : vector<16x256xf32> to vector<16xf32>
    %18 = vector.shape_cast %17 : vector<16xf32> to vector<16x1xf32>
    %19 = arith.addf %16, %18 : vector<16x1xf32>
    %c0_10 = arith.constant 0 : index
    %c0_11 = arith.constant 0 : index
    %20 = vector.load %arg4[%c0_10, %c0_11] : memref<16x1xf32, #tpu.memory_space<vmem>>, vector<16x1xf32>
    tpu.vector_store %arg4[%c0_10, %c0_11], %19 {strides = array<i32>} : memref<16x1xf32, #tpu.memory_space<vmem>>, vector<16x1xf32>,
    %c0_12 = arith.constant 0 : index
    %c0_13 = arith.constant 0 : index
    %21 = vector.load %arg6[%c0_12, %c0_13] : memref<16x1xf32, #tpu.memory_space<vmem>>, vector<16x1xf32>
    tpu.vector_store %arg6[%c0_12, %c0_13], %9 {strides = array<i32>} : memref<16x1xf32, #tpu.memory_space<vmem>>, vector<16x1xf32>,
    %c0_i32_14 = arith.constant 0 : i32
    %22 = arith.cmpi eq, %arg0, %c0_i32_14 : i32
    %23 = arith.extui %22 : i1 to i32
    %c0_i32_15 = arith.constant 0 : i32
    %24 = arith.cmpi ne, %23, %c0_i32_15 : i32
    scf.if %24 {
      %25 = tpu.iota {dimensions = array<i32: 1>} : vector<16x128xi32>
      %c0_i32_16 = arith.constant 0 : i32
      %26 = vector.broadcast %c0_i32_16 : i32 to vector<16x128xi32>
      %27 = arith.cmpi eq, %25, %26 : vector<16x128xi32>
      %c0_17 = arith.constant 0 : index
      %c0_18 = arith.constant 0 : index
      %28 = vector.load %arg4[%c0_17, %c0_18] : memref<16x1xf32, #tpu.memory_space<vmem>>, vector<16x1xf32>
      %cst_19 = arith.constant 0.000000e+00 : f32
      %29 = vector.shape_cast %28 : vector<16x1xf32> to vector<16x1xf32>
      %30 = vector.broadcast %29 : vector<16x1xf32> to vector<16x128xf32>
      %31 = vector.broadcast %cst_19 : f32 to vector<16x128xf32>
      %32 = arith.select %27, %30, %31 : vector<16x128xi1>, vector<16x128xf32>
      %c2_i32 = arith.constant 2 : i32
      %33 = vector.broadcast %c2_i32 : i32 to vector<16x128xi32>
      %34 = arith.cmpi eq, %25, %33 : vector<16x128xi32>
      %c0_20 = arith.constant 0 : index
      %c0_21 = arith.constant 0 : index
      %35 = vector.load %arg6[%c0_20, %c0_21] : memref<16x1xf32, #tpu.memory_space<vmem>>, vector<16x1xf32>
      %cst_22 = arith.constant 0.000000e+00 : f32
      %36 = vector.shape_cast %35 : vector<16x1xf32> to vector<16x1xf32>
      %37 = vector.broadcast %36 : vector<16x1xf32> to vector<16x128xf32>
      %38 = vector.broadcast %cst_22 : f32 to vector<16x128xf32>
      %39 = arith.select %34, %37, %38 : vector<16x128xi1>, vector<16x128xf32>
      %40 = arith.addf %32, %39 : vector<16x128xf32>
      %c0_23 = arith.constant 0 : index
      %c0_24 = arith.constant 0 : index
      %41 = vector.load %arg3[%c0_23, %c0_24] : memref<16x128xf32, #tpu.memory_space<vmem>>, vector<16x128xf32>
      tpu.vector_store %arg3[%c0_23, %c0_24], %40 {strides = array<i32>} : memref<16x128xf32, #tpu.memory_space<vmem>>, vector<16x128xf32>,
    } else {
    }
    return
  }
  func.func @transform_0(%arg0: i32) -> (i32, i32) {
    %c0_i32 = arith.constant 0 : i32
    %c0_i32_0 = arith.constant 0 : i32
    %c0_i32_1 = arith.constant 0 : i32
    return %c0_i32, %c0_i32_0 : i32, i32
  }
  func.func @transform_1(%arg0: i32) -> (i32, i32) {
    %c0_i32 = arith.constant 0 : i32
    %c0_i32_0 = arith.constant 0 : i32
    return %arg0, %c0_i32 : i32, i32
  }
  func.func @transform_2(%arg0: i32) -> (i32, i32) {
    %c0_i32 = arith.constant 0 : i32
    %c0_i32_0 = arith.constant 0 : i32
    %c0_i32_1 = arith.constant 0 : i32
    return %c0_i32, %c0_i32_0 : i32, i32
  }
}

</mosaic_0001>

<llo_original>
// kernel: tpu_custom_call.1
$region0: #{tpu_custom_call.1}
  #allocation0 [shape = 'u32[]', space=smem, size = 0x4, offset = 0x4, fixed_abs, tag = 'smem constant byte address 0x4 - core index']
  #allocation1 [shape = 'u32[144,128]{1,0:T(1,128)}', space=vmem, size = 0x12000, scoped, tag = 'internal scratch']
  #allocation2 [shape = 'f32[16,1]{1,0:T(8,128)}', space=vmem, size = 0x2000, scoped, tag = 'scratch operand']
  #allocation3 [shape = 'f32[16,1]{1,0:T(8,128)}', space=vmem, size = 0x2000, scoped, tag = 'scratch operand']
  #allocation4 [shape = 'f32[16,1]{1,0:T(8,128)}', space=vmem, size = 0x2000, scoped, tag = 'scratch operand']
  #allocation5 [shape = 'f32[16,1]{1,0:T(8,128)}', space=vmem, size = 0x2000, scoped, tag = 'scratch operand']
  %s0 = inlined_call_operand.vmem [shape: bf16[16,32], index: 0, kind: input, shape index: {}]
  %s1 = inlined_call_operand.vmem [shape: bf16[256,32], index: 1, kind: input, shape index: {}]
  %s2 = inlined_call_operand.hbm [shape: f32[16,128], index: 2, kind: output, shape index: {}]
  %s3 = sld [smem:[#allocation0]]
  $region26: #{tpu_custom_call.1} parent=0
    _
  %s5 = ssub.s32 1, %s3
  %s6 = scalar_select 0, %s5, %s3
  $region1: #{tpu_custom_call.1} parent=0
    #allocation6 [shape = 'u8[8192]{0}', space=vmem, size = 0x2000, scoped, tag = 'output window, operand 0, single buffered']
    #allocation7 [shape = 's32[1]{0}', space=sflag, size = 0x4, scoped, tag = 'scoped memory for tpu_custom_call.1']
    %7 = vsyncpa [#allocation7], 0
    // Predicated region
    $region2: #{tpu_custom_call.1} parent=1 // pred_check
      _
    $region3: #{tpu_custom_call.1} parent=1 // pred_check_branch
      %9 = sbr.rel (0) target = $region5
    $region4: #{tpu_custom_call.1} parent=1 // pred_region
      _
    $region5: #{tpu_custom_call.1} parent=1 // pred_fallthru
      _
    // Predicated region
    $region6: #{tpu_custom_call.1} parent=1 // pred_check
      _
    $region7: #{tpu_custom_call.1} parent=1 // pred_check_branch
      %11 = sbr.rel (0) target = $region9
    $region8: #{tpu_custom_call.1} parent=1 // pred_region
      _
    $region9: #{tpu_custom_call.1} parent=1 // pred_fallthru
      _
    %v13 = vld [vmem:[%s0] sm:$0xf]
    %v14 = vld [vmem:[%s0 + $0x4] sm:$0xf]
    %v15 = vld [vmem:[%s1] sm:$0xf]
    %v16 = vld [vmem:[%s1 + $0x4] sm:$0xf]
    %v17 = vld [vmem:[%s1 + $0x8] sm:$0xf]
    %v18 = vld [vmem:[%s1 + $0xc] sm:$0xf]
    %v19 = vld [vmem:[%s1 + $0x10] sm:$0xf]
    %v20 = vld [vmem:[%s1 + $0x14] sm:$0xf]
    %v21 = vld [vmem:[%s1 + $0x18] sm:$0xf]
    %v22 = vld [vmem:[%s1 + $0x1c] sm:$0xf]
    %v23 = vld [vmem:[%s1 + $0x20] sm:$0xf]
    %v24 = vld [vmem:[%s1 + $0x24] sm:$0xf]
    %v25 = vld [vmem:[%s1 + $0x28] sm:$0xf]
    %v26 = vld [vmem:[%s1 + $0x2c] sm:$0xf]
    %v27 = vld [vmem:[%s1 + $0x30] sm:$0xf]
    %v28 = vld [vmem:[%s1 + $0x34] sm:$0xf]
    %v29 = vld [vmem:[%s1 + $0x38] sm:$0xf]
    %v30 = vld [vmem:[%s1 + $0x3c] sm:$0xf]
    %v31 = vld [vmem:[%s1 + $0x40] sm:$0xf]
    %v32 = vld [vmem:[%s1 + $0x44] sm:$0xf]
    %v33 = vld [vmem:[%s1 + $0x48] sm:$0xf]
    %v34 = vld [vmem:[%s1 + $0x4c] sm:$0xf]
    %v35 = vld [vmem:[%s1 + $0x50] sm:$0xf]
    %v36 = vld [vmem:[%s1 + $0x54] sm:$0xf]
    %v37 = vld [vmem:[%s1 + $0x58] sm:$0xf]
    %v38 = vld [vmem:[%s1 + $0x5c] sm:$0xf]
    %v39 = vld [vmem:[%s1 + $0x60] sm:$0xf]
    %v40 = vld [vmem:[%s1 + $0x64] sm:$0xf]
    %v41 = vld [vmem:[%s1 + $0x68] sm:$0xf]
    %v42 = vld [vmem:[%s1 + $0x6c] sm:$0xf]
    %v43 = vld [vmem:[%s1 + $0x70] sm:$0xf]
    %v44 = vld [vmem:[%s1 + $0x74] sm:$0xf]
    %v45 = vld [vmem:[%s1 + $0x78] sm:$0xf]
    %v46 = vld [vmem:[%s1 + $0x7c] sm:$0xf]
    %v49 = vunpack.c.l.b16 %v13
    %v50 = vunpack.c.l.b16 %v14
    %v51 = vpack.c.b16 %v50, %v49
    %v84 = vunpack.c.l.b16 %v15
    %v85 = vunpack.c.l.b16 %v16
    %v86 = vunpack.c.l.b16 %v17
    %v87 = vunpack.c.l.b16 %v18
    %v88 = vunpack.c.l.b16 %v19
    %v89 = vunpack.c.l.b16 %v20
    %v90 = vunpack.c.l.b16 %v21
    %v91 = vunpack.c.l.b16 %v22
    %v92 = vunpack.c.l.b16 %v23
    %v93 = vunpack.c.l.b16 %v24
    %v94 = vunpack.c.l.b16 %v25
    %v95 = vunpack.c.l.b16 %v26
    %v96 = vunpack.c.l.b16 %v27
    %v97 = vunpack.c.l.b16 %v28
    %v98 = vunpack.c.l.b16 %v29
    %v99 = vunpack.c.l.b16 %v30
    %v100 = vunpack.c.l.b16 %v31
    %v101 = vunpack.c.l.b16 %v32
    %v102 = vunpack.c.l.b16 %v33
    %v103 = vunpack.c.l.b16 %v34
    %v104 = vunpack.c.l.b16 %v35
    %v105 = vunpack.c.l.b16 %v36
    %v106 = vunpack.c.l.b16 %v37
    %v107 = vunpack.c.l.b16 %v38
    %v108 = vunpack.c.l.b16 %v39
    %v109 = vunpack.c.l.b16 %v40
    %v110 = vunpack.c.l.b16 %v41
    %v111 = vunpack.c.l.b16 %v42
    %v112 = vunpack.c.l.b16 %v43
    %v113 = vunpack.c.l.b16 %v44
    %v114 = vunpack.c.l.b16 %v45
    %v115 = vunpack.c.l.b16 %v46
    %v116 = vpack.c.b16 %v85, %v84
    %v117 = vpack.c.b16 %v87, %v86
    %v118 = vpack.c.b16 %v89, %v88
    %v119 = vpack.c.b16 %v91, %v90
    %v120 = vpack.c.b16 %v93, %v92
    %v121 = vpack.c.b16 %v95, %v94
    %v122 = vpack.c.b16 %v97, %v96
    %v123 = vpack.c.b16 %v99, %v98
    %v124 = vpack.c.b16 %v101, %v100
    %v125 = vpack.c.b16 %v103, %v102
    %v126 = vpack.c.b16 %v105, %v104
    %v127 = vpack.c.b16 %v107, %v106
    %v128 = vpack.c.b16 %v109, %v108
    %v129 = vpack.c.b16 %v111, %v110
    %v130 = vpack.c.b16 %v113, %v112
    %v131 = vpack.c.b16 %v115, %v114
    %vm132 = vcmask 261120
    %v134 = vsel %vm132, %v51, 0
    %v137 = vsel %vm132, %v116, 0
    %v140 = vsel %vm132, %v117, 0
    %v143 = vsel %vm132, %v118, 0
    %v146 = vsel %vm132, %v119, 0
    %v149 = vsel %vm132, %v120, 0
    %v152 = vsel %vm132, %v121, 0
    %v155 = vsel %vm132, %v122, 0
    %v158 = vsel %vm132, %v123, 0
    %v161 = vsel %vm132, %v124, 0
    %v164 = vsel %vm132, %v125, 0
    %v167 = vsel %vm132, %v126, 0
    %v170 = vsel %vm132, %v127, 0
    %v173 = vsel %vm132, %v128, 0
    %v176 = vsel %vm132, %v129, 0
    %v179 = vsel %vm132, %v130, 0
    %v182 = vsel %vm132, %v131, 0
    %184 = vmatprep.subr.bf16.mxu0 0
    %185 = vmatpush1.bf16.xpose.msra.mxu0 %v137
    %186 = vmatprep.subr.bf16.mxu0 0
    %187 = vmatpush1.bf16.xpose.msra.mxu0 %v140
    %188 = vmatprep.subr.bf16.mxu0 0
    %189 = vmatpush1.bf16.xpose.msra.mxu0 %v143
    %190 = vmatprep.subr.bf16.mxu0 0
    %191 = vmatpush1.bf16.xpose.msra.mxu0 %v146
    %192 = vmatprep.subr.bf16.mxu0 0
    %193 = vmatpush1.bf16.xpose.msra.mxu0 %v149
    %194 = vmatprep.subr.bf16.mxu0 0
    %195 = vmatpush1.bf16.xpose.msra.mxu0 %v152
    %196 = vmatprep.subr.bf16.mxu0 0
    %197 = vmatpush1.bf16.xpose.msra.mxu0 %v155
    %198 = vmatprep.subr.bf16.mxu0 0
    %199 = vmatpush1.bf16.xpose.msra.mxu0 %v158
    %200 = vmatprep.subr.bf16.mxu0 0
    %201 = vmatpush1.bf16.xpose.msra.mxu0 %v161
    %202 = vmatprep.subr.bf16.mxu0 0
    %203 = vmatpush1.bf16.xpose.msra.mxu0 %v164
    %204 = vmatprep.subr.bf16.mxu0 0
    %205 = vmatpush1.bf16.xpose.msra.mxu0 %v167
    %206 = vmatprep.subr.bf16.mxu0 0
    %207 = vmatpush1.bf16.xpose.msra.mxu0 %v170
    %208 = vmatprep.subr.bf16.mxu0 0
    %209 = vmatpush1.bf16.xpose.msra.mxu0 %v173
    %210 = vmatprep.subr.bf16.mxu0 0
    %211 = vmatpush1.bf16.xpose.msra.mxu0 %v176
    %212 = vmatprep.subr.bf16.mxu0 0
    %213 = vmatpush1.bf16.xpose.msra.mxu0 %v179
    %214 = vmatprep.subr.bf16.mxu0 0
    %215 = vmatpush1.bf16.xpose.msra.mxu0 %v182
    %216 = vmatprep.mubr.bf16.mxu0 0
    %217 = vmatmul.mubr.bf16.gmra.mrb[0].mxu0 %v134
    %v218 = vpop.f32.mrb[0].mxu0
    %v219 = vadd.f32 0.0, %v218
    %v220 = vpop.f32.mrb[0].mxu0
    %v221 = vadd.f32 0.0, %v220
    %v222 = vpop.f32.mrb[0].mxu0
    %v223 = vadd.f32 0.0, %v222
    %v224 = vpop.f32.mrb[0].mxu0
    %v225 = vadd.f32 0.0, %v224
    %226 = vdwg.mxu0
    %p227 = scmp.eq.s32.totalorder 0, 0
    // Predicated region
    $region10: #{tpu_custom_call.1} parent=1 // pred_check
      %p228 = pneg %p227
    $region11: #{tpu_custom_call.1} parent=1 // pred_check_branch
      %230 = sbr.rel (%p228) target = $region13
    $region12: #{tpu_custom_call.1} parent=1 // pred_region
      %vm231 = vcmask 7168
      %232 = vst.msk [vmem:[#allocation4] sm:$0xff] %vm231, -inf
      %233 = vst.msk [vmem:[#allocation4 + $0x8] sm:$0xff] %vm231, -inf
      %234 = vst.msk [vmem:[#allocation2] sm:$0xff] %vm231, 0.0
      %235 = vst.msk [vmem:[#allocation2 + $0x8] sm:$0xff] %vm231, 0.0
    $region13: #{tpu_custom_call.1} parent=1 // pred_fallthru
      _
    %v236 = vld [vmem:[#allocation4] sm:$0xff]
    %v237 = vld [vmem:[#allocation4 + $0x8] sm:$0xff]
    %v238 = vmax.f32 %v219, %v221
    %239 = vmax.xlane.f32.xlu0 %v238
    %v240 = vpop.xlane.xlu0 %239
    %v241 = vmax.f32 %v223, %v225
    %242 = vmax.xlane.f32.xlu0 %v241
    %v243 = vpop.xlane.xlu0 %242
    %v244 = vmax.f32 %v236, %v240
    %v245 = vmax.f32 %v237, %v243
    %v246 = vsub.f32 %v236, %v244
    %v247 = vsub.f32 %v237, %v245
    %v248 = vmul.f32 %v246, 1.442695
    %v249 = vpow.pop %v248
    %v250 = vmul.f32 %v247, 1.442695
    %v251 = vpow.pop %v250
    %253 = vset.pattern.permute.xlu0 0
    %254 = vperm.xlu0 %253, %v244
    %v255 = vpop.permute.xlu0 %254
    %258 = vset.pattern.permute.xlu0 0
    %259 = vperm.xlu0 %258, %v245
    %v260 = vpop.permute.xlu0 %259
    %v262 = vsub.f32 %v219, %v255
    %v263 = vsub.f32 %v221, %v255
    %v264 = vsub.f32 %v223, %v260
    %v265 = vsub.f32 %v225, %v260
    %v266 = vmul.f32 %v262, 1.442695
    %v267 = vpow.pop %v266
    %v268 = vmul.f32 %v263, 1.442695
    %v269 = vpow.pop %v268
    %v270 = vmul.f32 %v264, 1.442695
    %v271 = vpow.pop %v270
    %v272 = vmul.f32 %v265, 1.442695
    %v273 = vpow.pop %v272
    %v274 = vld [vmem:[#allocation2] sm:$0xff]
    %v275 = vld [vmem:[#allocation2 + $0x8] sm:$0xff]
    %v276 = vmul.f32 %v274, %v249
    %v277 = vmul.f32 %v275, %v251
    %v278 = vadd.f32 %v267, %v269
    %279 = vadd.xlane.f32.xlu0 %v278
    %v280 = vpop.xlane.xlu0 %279
    %v281 = vadd.f32 %v271, %v273
    %282 = vadd.xlane.f32.xlu0 %v281
    %v283 = vpop.xlane.xlu0 %282
    %v284 = vadd.f32 %v276, %v280
    %v285 = vadd.f32 %v277, %v283
    %vm286 = vcmask 7168
    %287 = vst.msk [vmem:[#allocation2] sm:$0xff] %vm286, %v284
    %288 = vst.msk [vmem:[#allocation2 + $0x8] sm:$0xff] %vm286, %v285
    %289 = vst.msk [vmem:[#allocation4] sm:$0xff] %vm286, %v244
    %290 = vst.msk [vmem:[#allocation4 + $0x8] sm:$0xff] %vm286, %v245
    // Predicated region
    $region14: #{tpu_custom_call.1} parent=1 // pred_check
      %p291 = pneg %p227
    $region15: #{tpu_custom_call.1} parent=1 // pred_check_branch
      %293 = sbr.rel (%p291) target = $region17
    $region16: #{tpu_custom_call.1} parent=1 // pred_region
      %v294 = vlaneseq
      %v295 = vand.u32 %v294, 127
      %vm296 = vcmp.eq.s32.totalorder %v295, 0
      %v297 = vld [vmem:[#allocation2] sm:$0xff]
      %v298 = vld [vmem:[#allocation2 + $0x8] sm:$0xff]
      %300 = vset.pattern.permute.xlu0 0
      %301 = vperm.xlu0 %300, %v297
      %v302 = vpop.permute.xlu0 %301
      %305 = vset.pattern.permute.xlu0 0
      %306 = vperm.xlu0 %305, %v298
      %v307 = vpop.permute.xlu0 %306
      %v309 = vsel %vm296, %v302, 0.0
      %v310 = vsel %vm296, %v307, 0.0
      %vm311 = vcmp.eq.s32.totalorder %v295, 2
      %v312 = vld [vmem:[#allocation4] sm:$0xff]
      %v313 = vld [vmem:[#allocation4 + $0x8] sm:$0xff]
      %315 = vset.pattern.permute.xlu0 0
      %316 = vperm.xlu0 %315, %v312
      %v317 = vpop.permute.xlu0 %316
      %320 = vset.pattern.permute.xlu0 0
      %321 = vperm.xlu0 %320, %v313
      %v322 = vpop.permute.xlu0 %321
      %v324 = vsel %vm311, %v317, 0.0
      %v325 = vsel %vm311, %v322, 0.0
      %v326 = vadd.f32 %v309, %v324
      %v327 = vadd.f32 %v310, %v325
      %328 = vst [vmem:[#allocation6] sm:$0xff] %v326
      %329 = vst [vmem:[#allocation6 + $0x8] sm:$0xff] %v327
    $region17: #{tpu_custom_call.1} parent=1 // pred_fallthru
      _
    // Predicated region
    $region18: #{tpu_custom_call.1} parent=1 // pred_check
      _
    $region19: #{tpu_custom_call.1} parent=1 // pred_check_branch
      %331 = sbr.rel (0) target = $region21
    $region20: #{tpu_custom_call.1} parent=1 // pred_region
      %s333 = ssub.s32 256, 256
      %334 = vsyncadd [#allocation7], %s333
      %s335 = sshll.u32 [#allocation6], 4
      %s336 = int_to_ptr.vmem [resolvable:$true] %s335
      %341 = dma.vmem_to_hbm [thread:$0]  %s336, 256, %s2, [#allocation7], 128, 128, 8
    $region21: #{tpu_custom_call.1} parent=1 // pred_fallthru
      _
    // Predicated region
    $region22: #{tpu_custom_call.1} parent=1 // pred_check
      _
    $region23: #{tpu_custom_call.1} parent=1 // pred_check_branch
      %343 = sbr.rel (0) target = $region25
    $region24: #{tpu_custom_call.1} parent=1 // pred_region
      %344 = dma.done [#allocation7], 256
    $region25: #{tpu_custom_call.1} parent=1 // pred_fallthru
      _
    %345 = vsyncpa [#allocation7], 1

</llo_original>
